<compile_context>
chip_gen: v6e
topology: v6e:2x2x1
jax: 0.10.0
libtpu: 0.0.40
codegen_flags: <defaults>
</compile_context>

<pallas_src>
import jax
import jax.numpy as jnp
from jax.experimental import pallas as pl
from jax.experimental.pallas import tpu as pltpu


def _linear_kernel(x_ref, w_ref, b_ref, o_ref):
    # x_ref: (B, M), w_ref: (M, N) kernel layout, b_ref: (1, N)
    # Single MXU pass with f32 accumulation; bias add fused into the one store.
    acc = jnp.dot(x_ref[...], w_ref[...], preferred_element_type=jnp.float32)
    o_ref[...] = (acc + b_ref[...]).astype(o_ref.dtype)


def init_linear_params(weight, bias):
    """One-time conversion of PyTorch-layout params to kernel layout.

    weight: (N, M) PyTorch layout  ->  (M, N) kernel layout (free init cost)
    bias:   (N,)                   ->  (1, N) 2-D for TPU layout
    """
    w_t = jnp.asarray(weight).T
    b2 = jnp.asarray(bias).reshape(1, -1)
    return w_t, b2


def linear_pallas(x, w_t, b2):
    """y = x @ w_t + b2   (x: (B, M), w_t: (M, N), b2: (1, N))."""
    B, M = x.shape
    N = w_t.shape[1]

    cost = pl.CostEstimate(
        flops=2 * B * M * N,
        transcendentals=0,
        bytes_accessed=4 * (B * M + M * N + N + B * N),
    )

    # Grid-less call: whole operands live in VMEM (~22 KiB total, fits every
    # generation including v7x's 64 MiB), so there is no pipeline prologue /
    # epilogue or double-buffer DMA machinery for KiB-sized operands.
    vmem = pl.BlockSpec(memory_space=pltpu.MemorySpace.VMEM)
    return pl.pallas_call(
        _linear_kernel,
        out_shape=jax.ShapeDtypeStruct((B, N), x.dtype),
        in_specs=[vmem, vmem, vmem],
        out_specs=vmem,
        cost_estimate=cost,
    )(x, w_t, b2)


if __name__ == "__main__":
    # Small shapes consistent with the module: batch=8, in_features M=32,
    # out_features N=64.
    B, M, N = 8, 32, 64
    key = jax.random.PRNGKey(0)
    kx, kw, kb = jax.random.split(key, 3)

    # Deterministic parameter init (PyTorch-style uniform(-1/sqrt(M), 1/sqrt(M)))
    bound = 1.0 / (M ** 0.5)
    weight = jax.random.uniform(kw, (N, M), jnp.float32, -bound, bound)
    bias = jax.random.uniform(kb, (N,), jnp.float32, -bound, bound)
    x = jax.random.normal(kx, (B, M), jnp.float32)

    # One-time layout prep (analogous to module construction time).
    w_t, b2 = init_linear_params(weight, bias)

    forward = jax.jit(linear_pallas)
    y = forward(x, w_t, b2)
    jax.block_until_ready(y)

    # Sanity-check against plain JAX reference (exact f32 semantics).
    y_ref = x @ weight.T + bias
    assert y.shape == (B, N)
    assert jnp.allclose(y, y_ref, atol=1e-5, rtol=1e-5)
    print("KERNEL_OK")
</pallas_src>

<mosaic_0001>
module attributes {stable_mosaic.version = 11 : i64} {
  func.func @_linear_kernel(%arg0: memref<8x32xf32, #tpu.memory_space<vmem>>, %arg1: memref<32x64xf32, #tpu.memory_space<vmem>>, %arg2: memref<1x64xf32, #tpu.memory_space<vmem>>, %arg3: memref<8x64xf32, #tpu.memory_space<vmem>>) attributes {dimension_semantics = [], scalar_prefetch = 0 : i64, scratch_operands = 0 : i64, tpu.core_type = #tpu.core_type<tc>} {
    %c0 = arith.constant 0 : index
    %c0_0 = arith.constant 0 : index
    %0 = vector.load %arg0[%c0, %c0_0] : memref<8x32xf32, #tpu.memory_space<vmem>>, vector<8x32xf32>
    %c0_1 = arith.constant 0 : index
    %c0_2 = arith.constant 0 : index
    %1 = vector.load %arg1[%c0_1, %c0_2] : memref<32x64xf32, #tpu.memory_space<vmem>>, vector<32x64xf32>
    %cst = arith.constant dense<0.000000e+00> : vector<8x64xf32>
    %2 = tpu.matmul %0, %1, %cst {dimension_numbers = #tpu.dot_dimension_numbers<[1], [0], [0], [1], [0, 0, 1, 1], [], []>} : vector<8x32xf32>, vector<32x64xf32>, vector<8x64xf32> -> vector<8x64xf32>
    %c0_3 = arith.constant 0 : index
    %c0_4 = arith.constant 0 : index
    %3 = vector.load %arg2[%c0_3, %c0_4] : memref<1x64xf32, #tpu.memory_space<vmem>>, vector<1x64xf32>
    %4 = vector.broadcast %3 : vector<1x64xf32> to vector<8x64xf32>
    %5 = arith.addf %2, %4 : vector<8x64xf32>
    %c0_5 = arith.constant 0 : index
    %c0_6 = arith.constant 0 : index
    %6 = vector.load %arg3[%c0_5, %c0_6] : memref<8x64xf32, #tpu.memory_space<vmem>>, vector<8x64xf32>
    tpu.vector_store %arg3[%c0_5, %c0_6], %5 {strides = array<i32>} : memref<8x64xf32, #tpu.memory_space<vmem>>, vector<8x64xf32>,
    return
  }
}

</mosaic_0001>

<llo_original>
// kernel: linear_pallas.1
$region0: #{linear_pallas.1}
  #allocation0 [shape = 'u32[]', space=smem, size = 0x4, offset = 0x4, fixed_abs, tag = 'smem constant byte address 0x4 - core index']
  #allocation1 [shape = 'u32[144,128]{1,0:T(1,128)}', space=vmem, size = 0x12000, scoped, tag = 'internal scratch']
  %s0 = inlined_call_operand.hbm [shape: f32[8,32], index: 0, kind: input, shape index: {}]
  %s1 = inlined_call_operand.hbm [shape: f32[32,64], index: 1, kind: input, shape index: {}]
  %s2 = inlined_call_operand.vmem [shape: f32[1,64], index: 2, kind: input, shape index: {}]
  %s3 = inlined_call_operand.hbm [shape: f32[8,64], index: 3, kind: output, shape index: {}]
  %s4 = sld [smem:[#allocation0]]
  $region30: #{linear_pallas.1} parent=0
    _
  %s6 = ssub.s32 1, %s4
  %s7 = scalar_select 0, %s6, %s4
  $region1: #{linear_pallas.1} parent=0
    #allocation2 [shape = 'u8[4096]{0}', space=vmem, size = 0x1000, scoped, tag = 'input window, operand 0, single buffered']
    #allocation3 [shape = 's32[1]{0}', space=sflag, size = 0x4, scoped, tag = 'scoped memory for linear_pallas.1']
    #allocation4 [shape = 's32[1]{0}', space=sflag, size = 0x4, scoped, tag = 'scoped memory for linear_pallas.1']
    #allocation5 [shape = 'u8[16384]{0}', space=vmem, size = 0x4000, scoped, tag = 'input window, operand 1, single buffered']
    #allocation6 [shape = 's32[1]{0}', space=sflag, size = 0x4, scoped, tag = 'scoped memory for linear_pallas.1']
    #allocation7 [shape = 'u8[4096]{0}', space=vmem, size = 0x1000, scoped, tag = 'output window, operand 0, single buffered']
    %8 = vsyncpa [#allocation3], 0
    %9 = vsyncpa [#allocation6], 0
    %10 = vsyncpa [#allocation4], 0
    // Predicated region
    $region2: #{linear_pallas.1} parent=1 // pred_check
      _
    $region3: #{linear_pallas.1} parent=1 // pred_check_branch
      %12 = sbr.rel (0) target = $region5
    $region4: #{linear_pallas.1} parent=1 // pred_region
      %s14 = ssub.s32 128, 128
      %15 = vsyncadd [#allocation3], %s14
      %s17 = sshll.u32 [#allocation2], 4
      %s18 = int_to_ptr.vmem [resolvable:$true] %s17
      %20 = dma.hbm_to_vmem [thread:$0]  %s0, 128, %s18, [#allocation3]
    $region5: #{linear_pallas.1} parent=1 // pred_fallthru
      _
    // Predicated region
    $region6: #{linear_pallas.1} parent=1 // pred_check
      _
    $region7: #{linear_pallas.1} parent=1 // pred_check_branch
      %22 = sbr.rel (0) target = $region9
    $region8: #{linear_pallas.1} parent=1 // pred_region
      %s24 = ssub.s32 512, 512
      %25 = vsyncadd [#allocation6], %s24
      %s26 = sshll.u32 [#allocation5], 4
      %s27 = int_to_ptr.vmem [resolvable:$true] %s26
      %32 = dma.hbm_to_vmem [thread:$0]  %s1, 512, %s27, [#allocation6], 128, 128, 8
    $region9: #{linear_pallas.1} parent=1 // pred_fallthru
      _
    // Predicated region
    $region10: #{linear_pallas.1} parent=1 // pred_check
      _
    $region11: #{linear_pallas.1} parent=1 // pred_check_branch
      %34 = sbr.rel (0) target = $region13
    $region12: #{linear_pallas.1} parent=1 // pred_region
      _
    $region13: #{linear_pallas.1} parent=1 // pred_fallthru
      _
    // Predicated region
    $region14: #{linear_pallas.1} parent=1 // pred_check
      _
    $region15: #{linear_pallas.1} parent=1 // pred_check_branch
      %36 = sbr.rel (0) target = $region17
    $region16: #{linear_pallas.1} parent=1 // pred_region
      %37 = dma.done [#allocation3], 128
    $region17: #{linear_pallas.1} parent=1 // pred_fallthru
      _
    // Predicated region
    $region18: #{linear_pallas.1} parent=1 // pred_check
      _
    $region19: #{linear_pallas.1} parent=1 // pred_check_branch
      %39 = sbr.rel (0) target = $region21
    $region20: #{linear_pallas.1} parent=1 // pred_region
      %40 = dma.done [#allocation6], 512
    $region21: #{linear_pallas.1} parent=1 // pred_fallthru
      _
    %v41 = vld [vmem:[#allocation2] sm:$0xff]
    %v42 = vld [vmem:[#allocation5] sm:$0xff]
    %v43 = vld [vmem:[#allocation5 + $0x8] sm:$0xff]
    %v44 = vld [vmem:[#allocation5 + $0x10] sm:$0xff]
    %v45 = vld [vmem:[#allocation5 + $0x18] sm:$0xff]
    %v46 = vld [vmem:[%s2] sm:$0x1]
    %v48 = vlaneseq
    %v49 = vshrl.u32 %v48, 7
    %v50 = vsub.s32 0, %v49
    %v51 = vrot.slane %v46, %v50
    %vm53 = vcmask 261120
    %v55 = vsel %vm53, %v41, 0
    %57 = vmatprep.subr.mxu0 0.0
    %58 = vmatpush1.msra.mxu0 0.0
    %59 = vmatprep.subr.mxu0 0.0
    %60 = vmatpush1.msra.mxu0 0.0
    %61 = vmatprep.subr.mxu0 0.0
    %62 = vmatpush1.msra.mxu0 0.0
    %63 = vmatprep.subr.mxu0 0.0
    %64 = vmatpush1.msra.mxu0 0.0
    %65 = vmatprep.subr.mxu0 0.0
    %66 = vmatpush1.msra.mxu0 0.0
    %67 = vmatprep.subr.mxu0 0.0
    %68 = vmatpush1.msra.mxu0 0.0
    %69 = vmatprep.subr.mxu0 0.0
    %70 = vmatpush1.msra.mxu0 0.0
    %71 = vmatprep.subr.mxu0 0.0
    %72 = vmatpush1.msra.mxu0 0.0
    %73 = vmatprep.subr.mxu0 0.0
    %74 = vmatpush1.msra.mxu0 0.0
    %75 = vmatprep.subr.mxu0 0.0
    %76 = vmatpush1.msra.mxu0 0.0
    %77 = vmatprep.subr.mxu0 0.0
    %78 = vmatpush1.msra.mxu0 0.0
    %79 = vmatprep.subr.mxu0 0.0
    %80 = vmatpush1.msra.mxu0 0.0
    %81 = vmatprep.subr.mxu0 0.0
    %82 = vmatpush1.msra.mxu0 %v45
    %83 = vmatprep.subr.mxu0 0.0
    %84 = vmatpush1.msra.mxu0 %v44
    %85 = vmatprep.subr.mxu0 0.0
    %86 = vmatpush1.msra.mxu0 %v43
    %87 = vmatprep.subr.mxu0 0.0
    %88 = vmatpush1.msra.mxu0 %v42
    %89 = vmatprep.subr.mxu0 0.0
    %90 = vmatpush2.msra.mxu0 0.0
    %91 = vmatprep.subr.mxu0 0.0
    %92 = vmatpush2.msra.mxu0 0.0
    %93 = vmatprep.subr.mxu0 0.0
    %94 = vmatpush2.msra.mxu0 0.0
    %95 = vmatprep.subr.mxu0 0.0
    %96 = vmatpush2.msra.mxu0 0.0
    %97 = vmatprep.subr.mxu0 0.0
    %98 = vmatpush2.msra.mxu0 0.0
    %99 = vmatprep.subr.mxu0 0.0
    %100 = vmatpush2.msra.mxu0 0.0
    %101 = vmatprep.subr.mxu0 0.0
    %102 = vmatpush2.msra.mxu0 0.0
    %103 = vmatprep.subr.mxu0 0.0
    %104 = vmatpush2.msra.mxu0 0.0
    %105 = vmatprep.subr.mxu0 0.0
    %106 = vmatpush2.msra.mxu0 0.0
    %107 = vmatprep.subr.mxu0 0.0
    %108 = vmatpush2.msra.mxu0 0.0
    %109 = vmatprep.subr.mxu0 0.0
    %110 = vmatpush2.msra.mxu0 0.0
    %111 = vmatprep.subr.mxu0 0.0
    %112 = vmatpush2.msra.mxu0 0.0
    %113 = vmatprep.subr.mxu0 0.0
    %114 = vmatpush2.msra.mxu0 0.0
    %115 = vmatprep.subr.mxu0 0.0
    %116 = vmatpush2.msra.mxu0 0.0
    %117 = vmatprep.subr.mxu0 0.0
    %118 = vmatpush2.msra.mxu0 0.0
    %119 = vmatprep.subr.mxu0 0.0
    %120 = vmatpush2.msra.mxu0 0.0
    %121 = vmatprep.mubr.f32.mxu0 0.0
    %122 = vmatmul.mubr.f32.gmra.mxu0 %v55
    %v123 = vpop.f32.mrf.mxu0
    %v124 = vadd.f32 %v51, %v123
    %v125 = vpop.f32.mrf.mxu0
    %126 = vdwg.mxu0
    %vm127 = vcmask 523264
    %128 = vst.msk [vmem:[#allocation7] sm:$0xff] %vm127, %v124
    // Predicated region
    $region22: #{linear_pallas.1} parent=1 // pred_check
      _
    $region23: #{linear_pallas.1} parent=1 // pred_check_branch
      %130 = sbr.rel (0) target = $region25
    $region24: #{linear_pallas.1} parent=1 // pred_region
      %s132 = ssub.s32 128, 128
      %133 = vsyncadd [#allocation4], %s132
      %s135 = sshll.u32 [#allocation7], 4
      %s136 = int_to_ptr.vmem [resolvable:$true] %s135
      %138 = dma.vmem_to_hbm [thread:$0]  %s136, 128, %s3, [#allocation4]
    $region25: #{linear_pallas.1} parent=1 // pred_fallthru
      _
    // Predicated region
    $region26: #{linear_pallas.1} parent=1 // pred_check
      _
    $region27: #{linear_pallas.1} parent=1 // pred_check_branch
      %140 = sbr.rel (0) target = $region29
    $region28: #{linear_pallas.1} parent=1 // pred_region
      %141 = dma.done [#allocation4], 128
    $region29: #{linear_pallas.1} parent=1 // pred_fallthru
      _
    %142 = vsyncpa [#allocation3], 1
    %143 = vsyncpa [#allocation6], 1
    %144 = vsyncpa [#allocation4], 1

</llo_original>
